<compile_context>
chip_gen: v5e
topology: v5e:2x2
jax: 0.10.0
libtpu: 0.0.40
codegen_flags: <defaults>
</compile_context>

<pallas_src>
import jax
import jax.numpy as jnp
from jax.experimental import pallas as pl
from jax.experimental.pallas import tpu as pltpu


def _round_up(x, m):
    return ((x + m - 1) // m) * m


def nconv_matmul_kernel(at_ref, x_ref, o_ref):
    # at_ref: (W, V)  -- constant index_map -> fetched once, resident in VMEM
    # x_ref : (V, tm) -- lane-dense tile of X = (V, N*C*L)
    # o_ref : (W, tm) -- unmasked full-width stores except the last partial tile
    o_ref[...] = jnp.dot(
        at_ref[...], x_ref[...], preferred_element_type=jnp.float32
    ).astype(o_ref.dtype)


def nconv(x, A, *, tm_max=2048, compute_dtype=None):
    """x: (N, C, V, L), A: (V, W) -> (N, C, W, L); same semantics as
    torch.einsum('ncvl,vw->ncwl', x, A).

    tm_max: lane-tile upper bound (multiple of 128). 2048 is a good default on
    v5e/v6e/v7x; 4096 is worth sweeping on v7x (still well under its VMEM).
    compute_dtype: e.g. jnp.bfloat16 for ~2x on the HBM-bound streams
    (accumulation stays f32). Default: promoted input dtype (exact numerics).
    """
    N, C, V, L = x.shape
    Va, W = A.shape
    assert Va == V

    if compute_dtype is None:
        compute_dtype = jnp.result_type(x.dtype, A.dtype)
    x = x.astype(compute_dtype)
    A = A.astype(compute_dtype)

    M = N * C * L
    m128 = _round_up(M, 128)          # lane extent presented to the kernel

    # Balanced lane tiles (multiples of 128); last block may be partial.
    ntiles = pl.cdiv(m128, tm_max)
    tm = _round_up(pl.cdiv(m128, ntiles), 128)
    grid_m = pl.cdiv(m128, tm)

    # Present X with V as the contraction (sublane) axis and N*C*L lane-dense.
    # (Only relayout left in the wrapper; the <=127-col pad fuses into it.)
    x2 = jnp.transpose(x, (2, 0, 1, 3)).reshape(V, M)
    if m128 != M:
        x2 = jnp.pad(x2, ((0, 0), (0, m128 - M)))
    At = A.T  # (W, V), tiny

    out2 = pl.pallas_call(
        nconv_matmul_kernel,
        out_shape=jax.ShapeDtypeStruct((W, m128), compute_dtype),
        grid=(grid_m,),
        in_specs=[
            pl.BlockSpec((W, V), lambda m: (0, 0)),    # A^T resident every step
            pl.BlockSpec((V, tm), lambda m: (0, m)),   # lane-dense X tile
        ],
        out_specs=pl.BlockSpec((W, tm), lambda m: (0, m)),
        compiler_params=pltpu.CompilerParams(
            dimension_semantics=("parallel",),
        ),
    )(At, x2)

    # Un-pad lanes, restore NCWL layout (.contiguous() is a no-op in JAX).
    out = out2[:, :M].reshape(W, N, C, L)
    return jnp.transpose(out, (1, 2, 0, 3))


if __name__ == "__main__":
    key = jax.random.PRNGKey(0)
    kx, ka = jax.random.split(key)

    # Small shapes consistent with GraphWaveNet's nconv: x (N, C, V, L), A (V, V)
    N, C, V, L = 2, 4, 16, 8
    x = jax.random.normal(kx, (N, C, V, L), dtype=jnp.float32)
    A = jax.random.normal(ka, (V, V), dtype=jnp.float32)

    out = jax.block_until_ready(nconv(x, A))

    # Reference check against plain-JAX einsum (same semantics as torch.einsum)
    ref = jnp.einsum("ncvl,vw->ncwl", x, A)
    assert out.shape == ref.shape
    assert jnp.allclose(out, ref, atol=1e-4, rtol=1e-4)

    print("KERNEL_OK")
</pallas_src>

<mosaic_0001>
module attributes {stable_mosaic.version = 11 : i64} {
  func.func @nconv_matmul_kernel(%arg0: i32, %arg1: memref<16x16xf32, #tpu.memory_space<vmem>>, %arg2: memref<16x128xf32, #tpu.memory_space<vmem>>, %arg3: memref<16x128xf32, #tpu.memory_space<vmem>>) attributes {dimension_semantics = [#tpu.dimension_semantics<parallel>], iteration_bounds = array<i64: 1>, scalar_prefetch = 0 : i64, scratch_operands = 0 : i64, tpu.core_type = #tpu.core_type<tc>, window_params = [{pipeline_mode = #tpu.pipeline_mode<synchronous>, transform_indices = @transform_0, window_bounds = array<i64: 16, 16>}, {transform_indices = @transform_1, window_bounds = array<i64: 16, 128>}, {transform_indices = @transform_2, window_bounds = array<i64: 16, 128>}]} {
    %c0 = arith.constant 0 : index
    %c0_0 = arith.constant 0 : index
    %0 = vector.load %arg1[%c0, %c0_0] : memref<16x16xf32, #tpu.memory_space<vmem>>, vector<16x16xf32>
    %c0_1 = arith.constant 0 : index
    %c0_2 = arith.constant 0 : index
    %1 = vector.load %arg2[%c0_1, %c0_2] : memref<16x128xf32, #tpu.memory_space<vmem>>, vector<16x128xf32>
    %cst = arith.constant dense<0.000000e+00> : vector<16x128xf32>
    %2 = tpu.matmul %0, %1, %cst {dimension_numbers = #tpu.dot_dimension_numbers<[1], [0], [0], [1], [0, 0, 1, 1], [], []>} : vector<16x16xf32>, vector<16x128xf32>, vector<16x128xf32> -> vector<16x128xf32>
    %c0_3 = arith.constant 0 : index
    %c0_4 = arith.constant 0 : index
    %3 = vector.load %arg3[%c0_3, %c0_4] : memref<16x128xf32, #tpu.memory_space<vmem>>, vector<16x128xf32>
    tpu.vector_store %arg3[%c0_3, %c0_4], %2 {strides = array<i32>} : memref<16x128xf32, #tpu.memory_space<vmem>>, vector<16x128xf32>,
    return
  }
  func.func @transform_0(%arg0: i32) -> (i32, i32) {
    %c0_i32 = arith.constant 0 : i32
    %c0_i32_0 = arith.constant 0 : i32
    %c0_i32_1 = arith.constant 0 : i32
    return %c0_i32, %c0_i32_0 : i32, i32
  }
  func.func @transform_1(%arg0: i32) -> (i32, i32) {
    %c0_i32 = arith.constant 0 : i32
    %c0_i32_0 = arith.constant 0 : i32
    return %c0_i32, %arg0 : i32, i32
  }
  func.func @transform_2(%arg0: i32) -> (i32, i32) {
    %c0_i32 = arith.constant 0 : i32
    %c0_i32_0 = arith.constant 0 : i32
    return %c0_i32, %arg0 : i32, i32
  }
}

</mosaic_0001>

<llo_original>
// kernel: tpu_custom_call.1
$region0: #{tpu_custom_call.1}
  #allocation0 [shape = 'u32[]', space=smem, size = 0x4, offset = 0x4, fixed_abs, tag = 'smem constant byte address 0x4 - core index']
  #allocation1 [shape = 'u32[72,128]{1,0:T(1,128)}', space=vmem, size = 0x9000, scoped, tag = 'internal scratch']
  %s0 = inlined_call_operand.hbm [shape: f32[16,16], index: 0, kind: input, shape index: {}]
  %s1 = inlined_call_operand.hbm [shape: f32[16,128], index: 1, kind: input, shape index: {}]
  %s2 = inlined_call_operand.hbm [shape: f32[16,128], index: 2, kind: output, shape index: {}]
  %s3 = sld [smem:[#allocation0]]
  $region26: #{tpu_custom_call.1} parent=0
    _
  %s5 = ssub.s32 1, %s3
  %s6 = scalar_select 0, %s5, %s3
  $region1: #{tpu_custom_call.1} parent=0
    #allocation2 [shape = 'u8[8192]{0}', space=vmem, size = 0x2000, scoped, tag = 'input window, operand 0, single buffered']
    #allocation3 [shape = 's32[1]{0}', space=sflag, size = 0x4, scoped, tag = 'scoped memory for tpu_custom_call.1']
    #allocation4 [shape = 's32[1]{0}', space=sflag, size = 0x4, scoped, tag = 'scoped memory for tpu_custom_call.1']
    #allocation5 [shape = 'u8[8192]{0}', space=vmem, size = 0x2000, scoped, tag = 'input window, operand 1, single buffered']
    #allocation6 [shape = 's32[1]{0}', space=sflag, size = 0x4, scoped, tag = 'scoped memory for tpu_custom_call.1']
    #allocation7 [shape = 'u8[8192]{0}', space=vmem, size = 0x2000, scoped, tag = 'output window, operand 0, single buffered']
    %7 = vsyncpa [#allocation3], 0
    %8 = vsyncpa [#allocation6], 0
    %9 = vsyncpa [#allocation4], 0
    // Predicated region
    $region2: #{tpu_custom_call.1} parent=1 // pred_check
      _
    $region3: #{tpu_custom_call.1} parent=1 // pred_check_branch
      %11 = sbr.rel (0) target = $region5
    $region4: #{tpu_custom_call.1} parent=1 // pred_region
      %13 = vsyncadd [#allocation3], 0
      %s14 = sshll.u32 %s0, 4
      %s15 = int_to_ptr.hbm [resolvable:$true] %s14
      %s16 = sshll.u32 [#allocation2], 4
      %s17 = int_to_ptr.vmem [resolvable:$true] %s16
      %22 = dma.hbm_to_vmem [thread:$0]  %s15, 256, %s17, [#allocation3], 128, 128, 8
    $region5: #{tpu_custom_call.1} parent=1 // pred_fallthru
      _
    // Predicated region
    $region6: #{tpu_custom_call.1} parent=1 // pred_check
      _
    $region7: #{tpu_custom_call.1} parent=1 // pred_check_branch
      %24 = sbr.rel (0) target = $region9
    $region8: #{tpu_custom_call.1} parent=1 // pred_region
      %26 = vsyncadd [#allocation6], 0
      %s27 = sshll.u32 %s1, 4
      %s28 = int_to_ptr.hbm [resolvable:$true] %s27
      %s29 = sshll.u32 [#allocation5], 4
      %s30 = int_to_ptr.vmem [resolvable:$true] %s29
      %35 = dma.hbm_to_vmem [thread:$0]  %s28, 256, %s30, [#allocation6], 128, 128, 8
    $region9: #{tpu_custom_call.1} parent=1 // pred_fallthru
      _
    // Predicated region
    $region10: #{tpu_custom_call.1} parent=1 // pred_check
      _
    $region11: #{tpu_custom_call.1} parent=1 // pred_check_branch
      %37 = sbr.rel (0) target = $region13
    $region12: #{tpu_custom_call.1} parent=1 // pred_region
      %39 = dma.done [#allocation3], 256
    $region13: #{tpu_custom_call.1} parent=1 // pred_fallthru
      _
    // Predicated region
    $region14: #{tpu_custom_call.1} parent=1 // pred_check
      _
    $region15: #{tpu_custom_call.1} parent=1 // pred_check_branch
      %41 = sbr.rel (0) target = $region17
    $region16: #{tpu_custom_call.1} parent=1 // pred_region
      %43 = dma.done [#allocation6], 256
    $region17: #{tpu_custom_call.1} parent=1 // pred_fallthru
      _
    %v44 = vld [vmem:[#allocation2] sm:$0xff]
    %v45 = vld [vmem:[#allocation2 + $0x8] sm:$0xff]
    %v46 = vld [vmem:[#allocation5] sm:$0xff]
    %v47 = vld [vmem:[#allocation5 + $0x8] sm:$0xff]
    %vm48 = vcmask 130048
    %v50 = vsel %vm48, %v44, 0
    %v53 = vsel %vm48, %v45, 0
    %55 = vmatpush.msra.mxu0 0.0
    %56 = vmatpush.msra.mxu0 0.0
    %57 = vmatpush.msra.mxu0 0.0
    %58 = vmatpush.msra.mxu0 0.0
    %59 = vmatpush.msra.mxu0 0.0
    %60 = vmatpush.msra.mxu0 0.0
    %61 = vmatpush.msra.mxu0 0.0
    %62 = vmatpush.msra.mxu0 0.0
    %63 = vmatpush.msra.mxu0 0.0
    %64 = vmatpush.msra.mxu0 0.0
    %65 = vmatpush.msra.mxu0 0.0
    %66 = vmatpush.msra.mxu0 0.0
    %67 = vmatpush.msra.mxu0 0.0
    %68 = vmatpush.msra.mxu0 0.0
    %69 = vmatpush.msra.mxu0 %v47
    %70 = vmatpush.msra.mxu0 %v46
    %71 = vmatmul.f32.gmra.mxu0 %v50
    %v72 = vpop.f32.mrf.mxu0
    %v73 = vadd.f32 0.0, %v72
    %74 = vmatmul.f32.gmra.mxu0 %v53
    %v75 = vpop.f32.mrf.mxu0
    %v76 = vadd.f32 0.0, %v75
    %77 = vdwg.mxu0
    %78 = vst [vmem:[#allocation7] sm:$0xff] %v73
    %79 = vst [vmem:[#allocation7 + $0x8] sm:$0xff] %v76
    // Predicated region
    $region18: #{tpu_custom_call.1} parent=1 // pred_check
      _
    $region19: #{tpu_custom_call.1} parent=1 // pred_check_branch
      %81 = sbr.rel (0) target = $region21
    $region20: #{tpu_custom_call.1} parent=1 // pred_region
      %83 = vsyncadd [#allocation4], 0
      %s84 = sshll.u32 [#allocation7], 4
      %s85 = int_to_ptr.vmem [resolvable:$true] %s84
      %s86 = sshll.u32 %s2, 4
      %s87 = int_to_ptr.hbm [resolvable:$true] %s86
      %92 = dma.vmem_to_hbm [thread:$0]  %s85, 256, %s87, [#allocation4], 128, 128, 8
    $region21: #{tpu_custom_call.1} parent=1 // pred_fallthru
      _
    // Predicated region
    $region22: #{tpu_custom_call.1} parent=1 // pred_check
      _
    $region23: #{tpu_custom_call.1} parent=1 // pred_check_branch
      %94 = sbr.rel (0) target = $region25
    $region24: #{tpu_custom_call.1} parent=1 // pred_region
      %96 = dma.done [#allocation4], 256
    $region25: #{tpu_custom_call.1} parent=1 // pred_fallthru
      _
    %97 = vsyncpa [#allocation3], 1
    %98 = vsyncpa [#allocation6], 1
    %99 = vsyncpa [#allocation4], 1

</llo_original>
